<compile_context>
chip_gen: v7x
topology: tpu7x:2x2x1
jax: 0.10.0
libtpu: 0.0.40
codegen_flags: <defaults>
</compile_context>

<pallas_src>
import functools

import jax
import jax.numpy as jnp
from jax.experimental import pallas as pl
from jax.experimental.pallas import tpu as pltpu


def _round_up(x, m):
    return (x + m - 1) // m * m


# ----------------------------------------------------------------------------
# Fused kernel: the entire MLP on one (tm, feature) row tile.
# refs = (x_ref, z_ref, *param_refs, out_ref)
#   non-skip layer consumes (w_ref, b_ref)
#   skip layer consumes     (w_h_ref, w_z_ref, b_ref)    # split matmul
# ----------------------------------------------------------------------------
def _fused_mlp_kernel(skip_flags, *refs):
    x_ref, z_ref = refs[0], refs[1]
    out_ref = refs[-1]
    params = refs[2:-1]

    h = x_ref[...]
    z = z_ref[...]
    idx = 0
    for is_skip in skip_flags:
        if is_skip:
            w_h, w_z, b = params[idx], params[idx + 1], params[idx + 2]
            idx += 3
            y = jnp.dot(h, w_h[...], preferred_element_type=jnp.float32)
            y = y + jnp.dot(z, w_z[...], preferred_element_type=jnp.float32)
        else:
            w, b = params[idx], params[idx + 1]
            idx += 2
            y = jnp.dot(h, w[...], preferred_element_type=jnp.float32)
        h = jnp.maximum(y + b[...], 0.0)  # f32 bias + ReLU epilogue
    out_ref[...] = h.astype(out_ref.dtype)


# ----------------------------------------------------------------------------
# Wrapper: no padding / slicing, row-tiled grid, params resident in VMEM.
# ----------------------------------------------------------------------------
def mlp_with_input_skips_forward(params, skips, x, z):
    n, input_dim = x.shape
    skip_dim = z.shape[1]
    hidden_dim = params[0][0].shape[1]
    n_layers = len(params)
    # Layer-0 skip is ill-defined in the reference module (shape mismatch).
    assert 0 not in skips, "input_skips must not contain layer 0"

    skip_flags = tuple(bool(li in skips) for li in range(n_layers))

    # Flatten params; split skip-layer weights at the hidden_dim row boundary.
    flat_params = []
    for li, (w, b) in enumerate(params):
        b2 = b.reshape(1, -1)
        if skip_flags[li]:
            flat_params += [w[:hidden_dim], w[hidden_dim:], b2]
        else:
            flat_params += [w, b2]

    # Row tile: one step for small/medium n (single-TC friendly); an even
    # number of >= 2 steps with <= 1024-row tiles for large n (v7x megacore).
    if n <= 1024:
        tm = _round_up(max(n, 8), 8)
    else:
        steps = pl.cdiv(n, 1024)
        steps += steps % 2
        tm = _round_up(pl.cdiv(n, steps), 8)
    grid = (pl.cdiv(n, tm),)

    x_spec = pl.BlockSpec((tm, input_dim), lambda i: (i, 0))
    z_spec = pl.BlockSpec((tm, skip_dim), lambda i: (i, 0))
    out_spec = pl.BlockSpec((tm, hidden_dim), lambda i: (i, 0))
    in_specs = [x_spec, z_spec]
    for p in flat_params:
        in_specs.append(pl.BlockSpec(p.shape, lambda i: (0, 0)))  # resident

    flops = sum(2 * n * w.shape[0] * w.shape[1] for w, _ in params)
    bytes_accessed = 4 * (x.size + z.size + n * hidden_dim
                          + sum(int(p.size) for p in flat_params))
    cost = pl.CostEstimate(flops=int(flops), transcendentals=0,
                           bytes_accessed=int(bytes_accessed))

    param_bytes = sum(int(p.size) * 4 for p in flat_params)
    io_block_bytes = tm * (input_dim + skip_dim + hidden_dim) * 4
    vmem_limit = int(min(64 << 20,
                         max(16 << 20,
                             4 * io_block_bytes + 2 * param_bytes + (8 << 20))))

    return pl.pallas_call(
        functools.partial(_fused_mlp_kernel, skip_flags),
        out_shape=jax.ShapeDtypeStruct((n, hidden_dim), x.dtype),
        grid=grid,
        in_specs=in_specs,
        out_specs=out_spec,
        compiler_params=pltpu.CompilerParams(
            dimension_semantics=("parallel",),
            vmem_limit_bytes=vmem_limit),
        cost_estimate=cost,
    )(x, z, *flat_params)


# ----------------------------------------------------------------------------
# Parameter construction (mirrors torch.nn.Linear default init, deterministic)
# ----------------------------------------------------------------------------
def init_mlp_with_input_skips(key, n_layers, input_dim, output_dim, skip_dim,
                              hidden_dim, input_skips):
    del output_dim  # the reference module never uses output_dim either
    skips = set(input_skips)
    params = []
    for layeri in range(n_layers):
        if layeri == 0:
            dimin, dimout = input_dim, hidden_dim
        elif layeri in skips:
            dimin, dimout = hidden_dim + skip_dim, hidden_dim
        else:
            dimin, dimout = hidden_dim, hidden_dim
        key, kw, kb = jax.random.split(key, 3)
        bound = 1.0 / jnp.sqrt(jnp.float32(dimin))
        # store W as (in, out) so forward is x @ W
        w = jax.random.uniform(kw, (dimin, dimout), jnp.float32, -bound, bound)
        b = jax.random.uniform(kb, (dimout,), jnp.float32, -bound, bound)
        params.append((w, b))
    return params, skips


def mlp_reference(params, skips, x, z):
    y = x
    for li, (w, b) in enumerate(params):
        if li in skips:
            y = jnp.concatenate((y, z), axis=-1)
        y = jnp.maximum(y @ w + b, 0.0)
    return y


if __name__ == "__main__":
    # Small NeRF-style configuration.
    n_layers = 4
    input_dim = 48
    output_dim = 64      # unused by the module's forward (matches reference)
    skip_dim = 48
    hidden_dim = 64
    input_skips = (2,)

    root = jax.random.PRNGKey(0)
    kp, kx, kz = jax.random.split(root, 3)
    params, skips = init_mlp_with_input_skips(
        kp, n_layers, input_dim, output_dim, skip_dim, hidden_dim, input_skips)

    # N=128: aligned tile; N=200: exercises the ragged (non-multiple-of-8) tile.
    for N in (128, 200):
        kx, kxi = jax.random.split(kx)
        kz, kzi = jax.random.split(kz)
        x = jax.random.normal(kxi, (N, input_dim), jnp.float32)
        z = jax.random.normal(kzi, (N, skip_dim), jnp.float32)

        out = jax.block_until_ready(
            mlp_with_input_skips_forward(params, skips, x, z))
        ref = jax.block_until_ready(mlp_reference(params, skips, x, z))

        assert out.shape == (N, hidden_dim)
        assert jnp.allclose(out, ref, atol=1e-5, rtol=1e-5), (
            f"mismatch vs reference at N={N}")

    print("KERNEL_OK")
</pallas_src>

<mosaic_0001>
module attributes {stable_mosaic.version = 11 : i64} {
  func.func @_fused_mlp_kernel(%arg0: i32, %arg1: memref<128x48xf32, #tpu.memory_space<vmem>>, %arg2: memref<128x48xf32, #tpu.memory_space<vmem>>, %arg3: memref<48x64xf32, #tpu.memory_space<vmem>>, %arg4: memref<1x64xf32, #tpu.memory_space<vmem>>, %arg5: memref<64x64xf32, #tpu.memory_space<vmem>>, %arg6: memref<1x64xf32, #tpu.memory_space<vmem>>, %arg7: memref<64x64xf32, #tpu.memory_space<vmem>>, %arg8: memref<48x64xf32, #tpu.memory_space<vmem>>, %arg9: memref<1x64xf32, #tpu.memory_space<vmem>>, %arg10: memref<64x64xf32, #tpu.memory_space<vmem>>, %arg11: memref<1x64xf32, #tpu.memory_space<vmem>>, %arg12: memref<128x64xf32, #tpu.memory_space<vmem>>) attributes {dimension_semantics = [#tpu.dimension_semantics<parallel>], iteration_bounds = array<i64: 1>, scalar_prefetch = 0 : i64, scratch_operands = 0 : i64, tpu.core_type = #tpu.core_type<tc>, window_params = [{transform_indices = @transform_0, window_bounds = array<i64: 128, 48>}, {transform_indices = @transform_1, window_bounds = array<i64: 128, 48>}, {pipeline_mode = #tpu.pipeline_mode<synchronous>, transform_indices = @transform_2, window_bounds = array<i64: 48, 64>}, {pipeline_mode = #tpu.pipeline_mode<synchronous>, transform_indices = @transform_3, window_bounds = array<i64: 1, 64>}, {pipeline_mode = #tpu.pipeline_mode<synchronous>, transform_indices = @transform_4, window_bounds = array<i64: 64, 64>}, {pipeline_mode = #tpu.pipeline_mode<synchronous>, transform_indices = @transform_5, window_bounds = array<i64: 1, 64>}, {pipeline_mode = #tpu.pipeline_mode<synchronous>, transform_indices = @transform_6, window_bounds = array<i64: 64, 64>}, {pipeline_mode = #tpu.pipeline_mode<synchronous>, transform_indices = @transform_7, window_bounds = array<i64: 48, 64>}, {pipeline_mode = #tpu.pipeline_mode<synchronous>, transform_indices = @transform_8, window_bounds = array<i64: 1, 64>}, {pipeline_mode = #tpu.pipeline_mode<synchronous>, transform_indices = @transform_9, window_bounds = array<i64: 64, 64>}, {pipeline_mode = #tpu.pipeline_mode<synchronous>, transform_indices = @transform_10, window_bounds = array<i64: 1, 64>}, {transform_indices = @transform_11, window_bounds = array<i64: 128, 64>}]} {
    %c0 = arith.constant 0 : index
    %c0_0 = arith.constant 0 : index
    %0 = vector.load %arg1[%c0, %c0_0] : memref<128x48xf32, #tpu.memory_space<vmem>>, vector<128x48xf32>
    %c0_1 = arith.constant 0 : index
    %c0_2 = arith.constant 0 : index
    %1 = vector.load %arg2[%c0_1, %c0_2] : memref<128x48xf32, #tpu.memory_space<vmem>>, vector<128x48xf32>
    %c0_3 = arith.constant 0 : index
    %c0_4 = arith.constant 0 : index
    %2 = vector.load %arg3[%c0_3, %c0_4] : memref<48x64xf32, #tpu.memory_space<vmem>>, vector<48x64xf32>
    %cst = arith.constant dense<0.000000e+00> : vector<128x64xf32>
    %3 = tpu.matmul %0, %2, %cst {dimension_numbers = #tpu.dot_dimension_numbers<[1], [0], [0], [1], [0, 0, 1, 1], [], []>} : vector<128x48xf32>, vector<48x64xf32>, vector<128x64xf32> -> vector<128x64xf32>
    %c0_5 = arith.constant 0 : index
    %c0_6 = arith.constant 0 : index
    %4 = vector.load %arg4[%c0_5, %c0_6] : memref<1x64xf32, #tpu.memory_space<vmem>>, vector<1x64xf32>
    %5 = vector.broadcast %4 : vector<1x64xf32> to vector<128x64xf32>
    %6 = arith.addf %3, %5 : vector<128x64xf32>
    %cst_7 = arith.constant 0.000000e+00 : f32
    %7 = vector.broadcast %cst_7 : f32 to vector<128x64xf32>
    %8 = arith.maximumf %6, %7 : vector<128x64xf32>
    %c0_8 = arith.constant 0 : index
    %c0_9 = arith.constant 0 : index
    %9 = vector.load %arg5[%c0_8, %c0_9] : memref<64x64xf32, #tpu.memory_space<vmem>>, vector<64x64xf32>
    %cst_10 = arith.constant dense<0.000000e+00> : vector<128x64xf32>
    %10 = tpu.matmul %8, %9, %cst_10 {dimension_numbers = #tpu.dot_dimension_numbers<[1], [0], [0], [1], [0, 0, 1, 1], [], []>} : vector<128x64xf32>, vector<64x64xf32>, vector<128x64xf32> -> vector<128x64xf32>
    %c0_11 = arith.constant 0 : index
    %c0_12 = arith.constant 0 : index
    %11 = vector.load %arg6[%c0_11, %c0_12] : memref<1x64xf32, #tpu.memory_space<vmem>>, vector<1x64xf32>
    %12 = vector.broadcast %11 : vector<1x64xf32> to vector<128x64xf32>
    %13 = arith.addf %10, %12 : vector<128x64xf32>
    %cst_13 = arith.constant 0.000000e+00 : f32
    %14 = vector.broadcast %cst_13 : f32 to vector<128x64xf32>
    %15 = arith.maximumf %13, %14 : vector<128x64xf32>
    %c0_14 = arith.constant 0 : index
    %c0_15 = arith.constant 0 : index
    %16 = vector.load %arg7[%c0_14, %c0_15] : memref<64x64xf32, #tpu.memory_space<vmem>>, vector<64x64xf32>
    %cst_16 = arith.constant dense<0.000000e+00> : vector<128x64xf32>
    %17 = tpu.matmul %15, %16, %cst_16 {dimension_numbers = #tpu.dot_dimension_numbers<[1], [0], [0], [1], [0, 0, 1, 1], [], []>} : vector<128x64xf32>, vector<64x64xf32>, vector<128x64xf32> -> vector<128x64xf32>
    %c0_17 = arith.constant 0 : index
    %c0_18 = arith.constant 0 : index
    %18 = vector.load %arg8[%c0_17, %c0_18] : memref<48x64xf32, #tpu.memory_space<vmem>>, vector<48x64xf32>
    %cst_19 = arith.constant dense<0.000000e+00> : vector<128x64xf32>
    %19 = tpu.matmul %1, %18, %cst_19 {dimension_numbers = #tpu.dot_dimension_numbers<[1], [0], [0], [1], [0, 0, 1, 1], [], []>} : vector<128x48xf32>, vector<48x64xf32>, vector<128x64xf32> -> vector<128x64xf32>
    %20 = arith.addf %17, %19 : vector<128x64xf32>
    %c0_20 = arith.constant 0 : index
    %c0_21 = arith.constant 0 : index
    %21 = vector.load %arg9[%c0_20, %c0_21] : memref<1x64xf32, #tpu.memory_space<vmem>>, vector<1x64xf32>
    %22 = vector.broadcast %21 : vector<1x64xf32> to vector<128x64xf32>
    %23 = arith.addf %20, %22 : vector<128x64xf32>
    %cst_22 = arith.constant 0.000000e+00 : f32
    %24 = vector.broadcast %cst_22 : f32 to vector<128x64xf32>
    %25 = arith.maximumf %23, %24 : vector<128x64xf32>
    %c0_23 = arith.constant 0 : index
    %c0_24 = arith.constant 0 : index
    %26 = vector.load %arg10[%c0_23, %c0_24] : memref<64x64xf32, #tpu.memory_space<vmem>>, vector<64x64xf32>
    %cst_25 = arith.constant dense<0.000000e+00> : vector<128x64xf32>
    %27 = tpu.matmul %25, %26, %cst_25 {dimension_numbers = #tpu.dot_dimension_numbers<[1], [0], [0], [1], [0, 0, 1, 1], [], []>} : vector<128x64xf32>, vector<64x64xf32>, vector<128x64xf32> -> vector<128x64xf32>
    %c0_26 = arith.constant 0 : index
    %c0_27 = arith.constant 0 : index
    %28 = vector.load %arg11[%c0_26, %c0_27] : memref<1x64xf32, #tpu.memory_space<vmem>>, vector<1x64xf32>
    %29 = vector.broadcast %28 : vector<1x64xf32> to vector<128x64xf32>
    %30 = arith.addf %27, %29 : vector<128x64xf32>
    %cst_28 = arith.constant 0.000000e+00 : f32
    %31 = vector.broadcast %cst_28 : f32 to vector<128x64xf32>
    %32 = arith.maximumf %30, %31 : vector<128x64xf32>
    %c0_29 = arith.constant 0 : index
    %c0_30 = arith.constant 0 : index
    %33 = vector.load %arg12[%c0_29, %c0_30] : memref<128x64xf32, #tpu.memory_space<vmem>>, vector<128x64xf32>
    tpu.vector_store %arg12[%c0_29, %c0_30], %32 {strides = array<i32>} : memref<128x64xf32, #tpu.memory_space<vmem>>, vector<128x64xf32>,
    return
  }
  func.func @transform_0(%arg0: i32) -> (i32, i32) {
    %c0_i32 = arith.constant 0 : i32
    %c0_i32_0 = arith.constant 0 : i32
    return %arg0, %c0_i32 : i32, i32
  }
  func.func @transform_1(%arg0: i32) -> (i32, i32) {
    %c0_i32 = arith.constant 0 : i32
    %c0_i32_0 = arith.constant 0 : i32
    return %arg0, %c0_i32 : i32, i32
  }
  func.func @transform_2(%arg0: i32) -> (i32, i32) {
    %c0_i32 = arith.constant 0 : i32
    %c0_i32_0 = arith.constant 0 : i32
    %c0_i32_1 = arith.constant 0 : i32
    return %c0_i32, %c0_i32_0 : i32, i32
  }
  func.func @transform_3(%arg0: i32) -> (i32, i32) {
    %c0_i32 = arith.constant 0 : i32
    %c0_i32_0 = arith.constant 0 : i32
    %c0_i32_1 = arith.constant 0 : i32
    return %c0_i32, %c0_i32_0 : i32, i32
  }
  func.func @transform_4(%arg0: i32) -> (i32, i32) {
    %c0_i32 = arith.constant 0 : i32
    %c0_i32_0 = arith.constant 0 : i32
    %c0_i32_1 = arith.constant 0 : i32
    return %c0_i32, %c0_i32_0 : i32, i32
  }
  func.func @transform_5(%arg0: i32) -> (i32, i32) {
    %c0_i32 = arith.constant 0 : i32
    %c0_i32_0 = arith.constant 0 : i32
    %c0_i32_1 = arith.constant 0 : i32
    return %c0_i32, %c0_i32_0 : i32, i32
  }
  func.func @transform_6(%arg0: i32) -> (i32, i32) {
    %c0_i32 = arith.constant 0 : i32
    %c0_i32_0 = arith.constant 0 : i32
    %c0_i32_1 = arith.constant 0 : i32
    return %c0_i32, %c0_i32_0 : i32, i32
  }
  func.func @transform_7(%arg0: i32) -> (i32, i32) {
    %c0_i32 = arith.constant 0 : i32
    %c0_i32_0 = arith.constant 0 : i32
    %c0_i32_1 = arith.constant 0 : i32
    return %c0_i32, %c0_i32_0 : i32, i32
  }
  func.func @transform_8(%arg0: i32) -> (i32, i32) {
    %c0_i32 = arith.constant 0 : i32
    %c0_i32_0 = arith.constant 0 : i32
    %c0_i32_1 = arith.constant 0 : i32
    return %c0_i32, %c0_i32_0 : i32, i32
  }
  func.func @transform_9(%arg0: i32) -> (i32, i32) {
    %c0_i32 = arith.constant 0 : i32
    %c0_i32_0 = arith.constant 0 : i32
    %c0_i32_1 = arith.constant 0 : i32
    return %c0_i32, %c0_i32_0 : i32, i32
  }
  func.func @transform_10(%arg0: i32) -> (i32, i32) {
    %c0_i32 = arith.constant 0 : i32
    %c0_i32_0 = arith.constant 0 : i32
    %c0_i32_1 = arith.constant 0 : i32
    return %c0_i32, %c0_i32_0 : i32, i32
  }
  func.func @transform_11(%arg0: i32) -> (i32, i32) {
    %c0_i32 = arith.constant 0 : i32
    %c0_i32_0 = arith.constant 0 : i32
    return %arg0, %c0_i32 : i32, i32
  }
}

</mosaic_0001>

<llo_original>
// kernel: tpu_custom_call.1
$region0: #{tpu_custom_call.1}
  #allocation0 [shape = 'u32[]', space=smem, size = 0x4, offset = 0x4, fixed_abs, tag = 'smem constant byte address 0x4 - core index']
  #allocation1 [shape = 'u32[144,128]{1,0:T(1,128)}', space=vmem, size = 0x12000, scoped, tag = 'internal scratch']
  %s0 = inlined_call_operand.vmem [shape: f32[128,48], index: 0, kind: input, shape index: {}]
  %s1 = inlined_call_operand.vmem [shape: f32[128,48], index: 1, kind: input, shape index: {}]
  %s2 = inlined_call_operand.vmem [shape: f32[48,64], index: 2, kind: input, shape index: {}]
  %s3 = inlined_call_operand.vmem [shape: f32[1,64], index: 3, kind: input, shape index: {}]
  %s4 = inlined_call_operand.vmem [shape: f32[64,64], index: 4, kind: input, shape index: {}]
  %s5 = inlined_call_operand.vmem [shape: f32[1,64], index: 5, kind: input, shape index: {}]
  %s6 = inlined_call_operand.vmem [shape: f32[64,64], index: 6, kind: input, shape index: {}]
  %s7 = inlined_call_operand.vmem [shape: f32[48,64], index: 7, kind: input, shape index: {}]
  %s8 = inlined_call_operand.vmem [shape: f32[1,64], index: 8, kind: input, shape index: {}]
  %s9 = inlined_call_operand.vmem [shape: f32[64,64], index: 9, kind: input, shape index: {}]
  %s10 = inlined_call_operand.vmem [shape: f32[1,64], index: 10, kind: input, shape index: {}]
  %s11 = inlined_call_operand.vmem [shape: f32[128,64], index: 11, kind: output, shape index: {}]
  %s12 = sld [smem:[#allocation0]]
  $region54: #{tpu_custom_call.1} parent=0
    _
  %s14 = ssub.s32 1, %s12
  %s15 = scalar_select 0, %s14, %s12
  // Predicated region
  $region2: #{tpu_custom_call.1} parent=0 // pred_check
    _
  $region3: #{tpu_custom_call.1} parent=0 // pred_check_branch
    %17 = sbr.rel (0) target = $region5
  $region4: #{tpu_custom_call.1} parent=0 // pred_region
    _
  $region5: #{tpu_custom_call.1} parent=0 // pred_fallthru
    _
  // Predicated region
  $region6: #{tpu_custom_call.1} parent=0 // pred_check
    _
  $region7: #{tpu_custom_call.1} parent=0 // pred_check_branch
    %19 = sbr.rel (0) target = $region9
  $region8: #{tpu_custom_call.1} parent=0 // pred_region
    _
  $region9: #{tpu_custom_call.1} parent=0 // pred_fallthru
    _
  // Predicated region
  $region10: #{tpu_custom_call.1} parent=0 // pred_check
    _
  $region11: #{tpu_custom_call.1} parent=0 // pred_check_branch
    %21 = sbr.rel (0) target = $region13
  $region12: #{tpu_custom_call.1} parent=0 // pred_region
    _
  $region13: #{tpu_custom_call.1} parent=0 // pred_fallthru
    _
  // Predicated region
  $region14: #{tpu_custom_call.1} parent=0 // pred_check
    _
  $region15: #{tpu_custom_call.1} parent=0 // pred_check_branch
    %23 = sbr.rel (0) target = $region17
  $region16: #{tpu_custom_call.1} parent=0 // pred_region
    _
  $region17: #{tpu_custom_call.1} parent=0 // pred_fallthru
    _
  // Predicated region
  $region18: #{tpu_custom_call.1} parent=0 // pred_check
    _
  $region19: #{tpu_custom_call.1} parent=0 // pred_check_branch
    %25 = sbr.rel (0) target = $region21
  $region20: #{tpu_custom_call.1} parent=0 // pred_region
    _
  $region21: #{tpu_custom_call.1} parent=0 // pred_fallthru
    _
  // Predicated region
  $region22: #{tpu_custom_call.1} parent=0 // pred_check
    _
  $region23: #{tpu_custom_call.1} parent=0 // pred_check_branch
    %27 = sbr.rel (0) target = $region25
  $region24: #{tpu_custom_call.1} parent=0 // pred_region
    _
  $region25: #{tpu_custom_call.1} parent=0 // pred_fallthru
    _
  // Predicated region
  $region26: #{tpu_custom_call.1} parent=0 // pred_check
    _
  $region27: #{tpu_custom_call.1} parent=0 // pred_check_branch
    %29 = sbr.rel (0) target = $region29
  $region28: #{tpu_custom_call.1} parent=0 // pred_region
    _
  $region29: #{tpu_custom_call.1} parent=0 // pred_fallthru
    _
  // Predicated region
  $region30: #{tpu_custom_call.1} parent=0 // pred_check
    _
  $region31: #{tpu_custom_call.1} parent=0 // pred_check_branch
    %31 = sbr.rel (0) target = $region33
  $region32: #{tpu_custom_call.1} parent=0 // pred_region
    _
  $region33: #{tpu_custom_call.1} parent=0 // pred_fallthru
    _
  // Predicated region
  $region34: #{tpu_custom_call.1} parent=0 // pred_check
    _
  $region35: #{tpu_custom_call.1} parent=0 // pred_check_branch
    %33 = sbr.rel (0) target = $region37
  $region36: #{tpu_custom_call.1} parent=0 // pred_region
    _
  $region37: #{tpu_custom_call.1} parent=0 // pred_fallthru
    _
  // Predicated region
  $region38: #{tpu_custom_call.1} parent=0 // pred_check
    _
  $region39: #{tpu_custom_call.1} parent=0 // pred_check_branch
    %35 = sbr.rel (0) target = $region41
  $region40: #{tpu_custom_call.1} parent=0 // pred_region
    _
  $region41: #{tpu_custom_call.1} parent=0 // pred_fallthru
    _
  // Predicated region
  $region42: #{tpu_custom_call.1} parent=0 // pred_check
    _
  $region43: #{tpu_custom_call.1} parent=0 // pred_check_branch
    %37 = sbr.rel (0) target = $region45
  $region44: #{tpu_custom_call.1} parent=0 // pred_region
    _
  $region45: #{tpu_custom_call.1} parent=0 // pred_fallthru
    _
  %v38 = vld [vmem:[%s0] sm:$0xff]
  %v39 = vld [vmem:[%s0 + $0x8] sm:$0xff]
  %v40 = vld [vmem:[%s0 + $0x10] sm:$0xff]
  %v41 = vld [vmem:[%s0 + $0x18] sm:$0xff]
  %v42 = vld [vmem:[%s0 + $0x20] sm:$0xff]
  %v43 = vld [vmem:[%s0 + $0x28] sm:$0xff]
  %v44 = vld [vmem:[%s0 + $0x30] sm:$0xff]
  %v45 = vld [vmem:[%s0 + $0x38] sm:$0xff]
  %v46 = vld [vmem:[%s0 + $0x40] sm:$0xff]
  %v47 = vld [vmem:[%s0 + $0x48] sm:$0xff]
  %v48 = vld [vmem:[%s0 + $0x50] sm:$0xff]
  %v49 = vld [vmem:[%s0 + $0x58] sm:$0xff]
  %v50 = vld [vmem:[%s0 + $0x60] sm:$0xff]
  %v51 = vld [vmem:[%s0 + $0x68] sm:$0xff]
  %v52 = vld [vmem:[%s0 + $0x70] sm:$0xff]
  %v53 = vld [vmem:[%s0 + $0x78] sm:$0xff]
  %v54 = vld [vmem:[%s1] sm:$0xff]
  %v55 = vld [vmem:[%s1 + $0x8] sm:$0xff]
  %v56 = vld [vmem:[%s1 + $0x10] sm:$0xff]
  %v57 = vld [vmem:[%s1 + $0x18] sm:$0xff]
  %v58 = vld [vmem:[%s1 + $0x20] sm:$0xff]
  %v59 = vld [vmem:[%s1 + $0x28] sm:$0xff]
  %v60 = vld [vmem:[%s1 + $0x30] sm:$0xff]
  %v61 = vld [vmem:[%s1 + $0x38] sm:$0xff]
  %v62 = vld [vmem:[%s1 + $0x40] sm:$0xff]
  %v63 = vld [vmem:[%s1 + $0x48] sm:$0xff]
  %v64 = vld [vmem:[%s1 + $0x50] sm:$0xff]
  %v65 = vld [vmem:[%s1 + $0x58] sm:$0xff]
  %v66 = vld [vmem:[%s1 + $0x60] sm:$0xff]
  %v67 = vld [vmem:[%s1 + $0x68] sm:$0xff]
  %v68 = vld [vmem:[%s1 + $0x70] sm:$0xff]
  %v69 = vld [vmem:[%s1 + $0x78] sm:$0xff]
  %v70 = vld [vmem:[%s2] sm:$0xff]
  %v71 = vld [vmem:[%s2 + $0x8] sm:$0xff]
  %v72 = vld [vmem:[%s2 + $0x10] sm:$0xff]
  %v73 = vld [vmem:[%s2 + $0x18] sm:$0xff]
  %v74 = vld [vmem:[%s2 + $0x20] sm:$0xff]
  %v75 = vld [vmem:[%s2 + $0x28] sm:$0xff]
  %v76 = vld [vmem:[%s3] sm:$0x1]
  %v78 = vlaneseq
  %v79 = vshrl.u32 %v78, 7
  %v80 = vsub.s32 0, %v79
  %v81 = vrot.slane %v76, %v80
  %vm83 = vcmask 392192
  %v85 = vsel %vm83, %v38, 0
  %v88 = vsel %vm83, %v39, 0
  %v91 = vsel %vm83, %v40, 0
  %v94 = vsel %vm83, %v41, 0
  %v97 = vsel %vm83, %v42, 0
  %v100 = vsel %vm83, %v43, 0
  %v103 = vsel %vm83, %v44, 0
  %v106 = vsel %vm83, %v45, 0
  %v109 = vsel %vm83, %v46, 0
  %v112 = vsel %vm83, %v47, 0
  %v115 = vsel %vm83, %v48, 0
  %v118 = vsel %vm83, %v49, 0
  %v121 = vsel %vm83, %v50, 0
  %v124 = vsel %vm83, %v51, 0
  %v127 = vsel %vm83, %v52, 0
  %v130 = vsel %vm83, %v53, 0
  %132 = vmatprep.subr.mxu0 0.0
  %133 = vmatpush1.msra.mxu0 %v70
  %134 = vmatprep.subr.mxu0 0.0
  %135 = vmatpush1.msra.mxu0 %v71
  %136 = vmatprep.subr.mxu0 0.0
  %137 = vmatpush1.msra.mxu0 %v72
  %138 = vmatprep.subr.mxu0 0.0
  %139 = vmatpush1.msra.mxu0 %v73
  %140 = vmatprep.subr.mxu0 0.0
  %141 = vmatpush1.msra.mxu0 %v74
  %142 = vmatprep.subr.mxu0 0.0
  %143 = vmatpush1.msra.mxu0 %v75
  %144 = vmatprep.subr.mxu0 0.0
  %145 = vmatpush1.msra.mxu0 0.0
  %146 = vmatprep.subr.mxu0 0.0
  %147 = vmatpush1.msra.mxu0 0.0
  %148 = vmatprep.subr.mxu0 0.0
  %149 = vmatpush1.msra.mxu0 0.0
  %150 = vmatprep.subr.mxu0 0.0
  %151 = vmatpush1.msra.mxu0 0.0
  %152 = vmatprep.subr.mxu0 0.0
  %153 = vmatpush1.msra.mxu0 0.0
  %154 = vmatprep.subr.mxu0 0.0
  %155 = vmatpush1.msra.mxu0 0.0
  %156 = vmatprep.subr.mxu0 0.0
  %157 = vmatpush1.msra.mxu0 0.0
  %158 = vmatprep.subr.mxu0 0.0
  %159 = vmatpush1.msra.mxu0 0.0
  %160 = vmatprep.subr.mxu0 0.0
  %161 = vmatpush1.msra.mxu0 0.0
  %162 = vmatprep.subr.mxu0 0.0
  %163 = vmatpush1.msra.mxu0 0.0
  %164 = vmatprep.subr.mxu0 0.0
  %165 = vmatpush1.msra.mxu0 0.0
  %166 = vmatprep.subr.mxu0 0.0
  %167 = vmatpush1.msra.mxu0 0.0
  %168 = vmatprep.subr.mxu0 0.0
  %169 = vmatpush1.msra.mxu0 0.0
  %170 = vmatprep.subr.mxu0 0.0
  %171 = vmatpush1.msra.mxu0 0.0
  %172 = vmatprep.subr.mxu0 0.0
  %173 = vmatpush1.msra.mxu0 0.0
  %174 = vmatprep.subr.mxu0 0.0
  %175 = vmatpush1.msra.mxu0 0.0
  %176 = vmatprep.subr.mxu0 0.0
  %177 = vmatpush1.msra.mxu0 0.0
  %178 = vmatprep.subr.mxu0 0.0
  %179 = vmatpush1.msra.mxu0 0.0
  %180 = vmatprep.subr.mxu0 0.0
  %181 = vmatpush1.msra.mxu0 0.0
  %182 = vmatprep.subr.mxu0 0.0
  %183 = vmatpush1.msra.mxu0 0.0
  %184 = vmatprep.subr.mxu0 0.0
  %185 = vmatpush1.msra.mxu0 0.0
  %186 = vmatprep.subr.mxu0 0.0
  %187 = vmatpush1.msra.mxu0 0.0
  %188 = vmatprep.subr.mxu0 0.0
  %189 = vmatpush1.msra.mxu0 0.0
  %190 = vmatprep.subr.mxu0 0.0
  %191 = vmatpush1.msra.mxu0 0.0
  %192 = vmatprep.subr.mxu0 0.0
  %193 = vmatpush1.msra.mxu0 0.0
  %194 = vmatprep.subr.mxu0 0.0
  %195 = vmatpush1.msra.mxu0 0.0
  %196 = vmatprep.mubr.f32.mxu0 0.0
  %197 = vmatmul.mubr.f32.gmra.mrb[0].mxu0 %v85
  %v198 = vpop.f32.mrb[0].mxu0
  %v199 = vadd.f32 %v81, %v198
  %v200 = vpop.f32.mrb[0].mxu0
  %201 = vmatprep.mubr.f32.mxu0 0.0
  %202 = vmatmul.mubr.f32.gmra.mrb[0].mxu0 %v88
  %v203 = vpop.f32.mrb[0].mxu0
  %v204 = vadd.f32 %v81, %v203
  %v205 = vpop.f32.mrb[0].mxu0
  %206 = vmatprep.mubr.f32.mxu0 0.0
  %207 = vmatmul.mubr.f32.gmra.mrb[0].mxu0 %v91
  %v208 = vpop.f32.mrb[0].mxu0
  %v209 = vadd.f32 %v81, %v208
  %v210 = vpop.f32.mrb[0].mxu0
  %211 = vmatprep.mubr.f32.mxu0 0.0
  %212 = vmatmul.mubr.f32.gmra.mrb[0].mxu0 %v94
  %v213 = vpop.f32.mrb[0].mxu0
  %v214 = vadd.f32 %v81, %v213
  %v215 = vpop.f32.mrb[0].mxu0
  %216 = vmatprep.mubr.f32.mxu0 0.0
  %217 = vmatmul.mubr.f32.gmra.mrb[0].mxu0 %v97
  %v218 = vpop.f32.mrb[0].mxu0
  %v219 = vadd.f32 %v81, %v218
  %v220 = vpop.f32.mrb[0].mxu0
  %221 = vmatprep.mubr.f32.mxu0 0.0
  %222 = vmatmul.mubr.f32.gmra.mrb[0].mxu0 %v100
  %v223 = vpop.f32.mrb[0].mxu0
  %v224 = vadd.f32 %v81, %v223
  %v225 = vpop.f32.mrb[0].mxu0
  %226 = vmatprep.mubr.f32.mxu0 0.0
  %227 = vmatmul.mubr.f32.gmra.mrb[0].mxu0 %v103
  %v228 = vpop.f32.mrb[0].mxu0
  %v229 = vadd.f32 %v81, %v228
  %v230 = vpop.f32.mrb[0].mxu0
  %231 = vmatprep.mubr.f32.mxu0 0.0
  %232 = vmatmul.mubr.f32.gmra.mrb[0].mxu0 %v106
  %v233 = vpop.f32.mrb[0].mxu0
  %v234 = vadd.f32 %v81, %v233
  %v235 = vpop.f32.mrb[0].mxu0
  %236 = vmatprep.mubr.f32.mxu0 0.0
  %237 = vmatmul.mubr.f32.gmra.mrb[0].mxu0 %v109
  %v238 = vpop.f32.mrb[0].mxu0
  %v239 = vadd.f32 %v81, %v238
  %v240 = vpop.f32.mrb[0].mxu0
  %241 = vmatprep.mubr.f32.mxu0 0.0
  %242 = vmatmul.mubr.f32.gmra.mrb[0].mxu0 %v112
  %v243 = vpop.f32.mrb[0].mxu0
  %v244 = vadd.f32 %v81, %v243
  %v245 = vpop.f32.mrb[0].mxu0
  %246 = vmatprep.mubr.f32.mxu0 0.0
  %247 = vmatmul.mubr.f32.gmra.mrb[0].mxu0 %v115
  %v248 = vpop.f32.mrb[0].mxu0
  %v249 = vadd.f32 %v81, %v248
  %v250 = vpop.f32.mrb[0].mxu0
  %251 = vmatprep.mubr.f32.mxu0 0.0
  %252 = vmatmul.mubr.f32.gmra.mrb[0].mxu0 %v118
  %v253 = vpop.f32.mrb[0].mxu0
  %v254 = vadd.f32 %v81, %v253
  %v255 = vpop.f32.mrb[0].mxu0
  %256 = vmatprep.mubr.f32.mxu0 0.0
  %257 = vmatmul.mubr.f32.gmra.mrb[0].mxu0 %v121
  %v258 = vpop.f32.mrb[0].mxu0
  %v259 = vadd.f32 %v81, %v258
  %v260 = vpop.f32.mrb[0].mxu0
  %261 = vmatprep.mubr.f32.mxu0 0.0
  %262 = vmatmul.mubr.f32.gmra.mrb[0].mxu0 %v124
  %v263 = vpop.f32.mrb[0].mxu0
  %v264 = vadd.f32 %v81, %v263
  %v265 = vpop.f32.mrb[0].mxu0
  %266 = vmatprep.mubr.f32.mxu0 0.0
  %267 = vmatmul.mubr.f32.gmra.mrb[0].mxu0 %v127
  %v268 = vpop.f32.mrb[0].mxu0
  %v269 = vadd.f32 %v81, %v268
  %v270 = vpop.f32.mrb[0].mxu0
  %271 = vmatprep.mubr.f32.mxu0 0.0
  %272 = vmatmul.mubr.f32.gmra.mrb[0].mxu0 %v130
  %v273 = vpop.f32.mrb[0].mxu0
  %v274 = vadd.f32 %v81, %v273
  %v275 = vpop.f32.mrb[0].mxu0
  %276 = vdwg.mxu0
  %v277 = vmax.f32 %v199, 0.0
  %v278 = vmax.f32 %v204, 0.0
  %v279 = vmax.f32 %v209, 0.0
  %v280 = vmax.f32 %v214, 0.0
  %v281 = vmax.f32 %v219, 0.0
  %v282 = vmax.f32 %v224, 0.0
  %v283 = vmax.f32 %v229, 0.0
  %v284 = vmax.f32 %v234, 0.0
  %v285 = vmax.f32 %v239, 0.0
  %v286 = vmax.f32 %v244, 0.0
  %v287 = vmax.f32 %v249, 0.0
  %v288 = vmax.f32 %v254, 0.0
  %v289 = vmax.f32 %v259, 0.0
  %v290 = vmax.f32 %v264, 0.0
  %v291 = vmax.f32 %v269, 0.0
  %v292 = vmax.f32 %v274, 0.0
  %v293 = vld [vmem:[%s4] sm:$0xff]
  %v294 = vld [vmem:[%s4 + $0x8] sm:$0xff]
  %v295 = vld [vmem:[%s4 + $0x10] sm:$0xff]
  %v296 = vld [vmem:[%s4 + $0x18] sm:$0xff]
  %v297 = vld [vmem:[%s4 + $0x20] sm:$0xff]
  %v298 = vld [vmem:[%s4 + $0x28] sm:$0xff]
  %v299 = vld [vmem:[%s4 + $0x30] sm:$0xff]
  %v300 = vld [vmem:[%s4 + $0x38] sm:$0xff]
  %v301 = vld [vmem:[%s5] sm:$0x1]
  %v303 = vlaneseq
  %v304 = vshrl.u32 %v303, 7
  %v305 = vsub.s32 0, %v304
  %v306 = vrot.slane %v301, %v305
  %vm308 = vcmask 523264
  %v310 = vsel %vm308, %v277, 0
  %v313 = vsel %vm308, %v278, 0
  %v316 = vsel %vm308, %v279, 0
  %v319 = vsel %vm308, %v280, 0
  %v322 = vsel %vm308, %v281, 0
  %v325 = vsel %vm308, %v282, 0
  %v328 = vsel %vm308, %v283, 0
  %v331 = vsel %vm308, %v284, 0
  %v334 = vsel %vm308, %v285, 0
  %v337 = vsel %vm308, %v286, 0
  %v340 = vsel %vm308, %v287, 0
  %v343 = vsel %vm308, %v288, 0
  %v346 = vsel %vm308, %v289, 0
  %v349 = vsel %vm308, %v290, 0
  %v352 = vsel %vm308, %v291, 0
  %v355 = vsel %vm308, %v292, 0
  %357 = vmatprep.subr.mxu0 0.0
  %358 = vmatpush1.msra.mxu0 %v293
  %359 = vmatprep.subr.mxu0 0.0
  %360 = vmatpush1.msra.mxu0 %v294
  %361 = vmatprep.subr.mxu0 0.0
  %362 = vmatpush1.msra.mxu0 %v295
  %363 = vmatprep.subr.mxu0 0.0
  %364 = vmatpush1.msra.mxu0 %v296
  %365 = vmatprep.subr.mxu0 0.0
  %366 = vmatpush1.msra.mxu0 %v297
  %367 = vmatprep.subr.mxu0 0.0
  %368 = vmatpush1.msra.mxu0 %v298
  %369 = vmatprep.subr.mxu0 0.0
  %370 = vmatpush1.msra.mxu0 %v299
  %371 = vmatprep.subr.mxu0 0.0
  %372 = vmatpush1.msra.mxu0 %v300
  %373 = vmatprep.subr.mxu0 0.0
  %374 = vmatpush1.msra.mxu0 0.0
  %375 = vmatprep.subr.mxu0 0.0
  %376 = vmatpush1.msra.mxu0 0.0
  %377 = vmatprep.subr.mxu0 0.0
  %378 = vmatpush1.msra.mxu0 0.0
  %379 = vmatprep.subr.mxu0 0.0
  %380 = vmatpush1.msra.mxu0 0.0
  %381 = vmatprep.subr.mxu0 0.0
  %382 = vmatpush1.msra.mxu0 0.0
  %383 = vmatprep.subr.mxu0 0.0
  %384 = vmatpush1.msra.mxu0 0.0
  %385 = vmatprep.subr.mxu0 0.0
  %386 = vmatpush1.msra.mxu0 0.0
  %387 = vmatprep.subr.mxu0 0.0
  %388 = vmatpush1.msra.mxu0 0.0
  %389 = vmatprep.subr.mxu0 0.0
  %390 = vmatpush1.msra.mxu0 0.0
  %391 = vmatprep.subr.mxu0 0.0
  %392 = vmatpush1.msra.mxu0 0.0
  %393 = vmatprep.subr.mxu0 0.0
  %394 = vmatpush1.msra.mxu0 0.0
  %395 = vmatprep.subr.mxu0 0.0
  %396 = vmatpush1.msra.mxu0 0.0
  %397 = vmatprep.subr.mxu0 0.0
  %398 = vmatpush1.msra.mxu0 0.0
  %399 = vmatprep.subr.mxu0 0.0
  %400 = vmatpush1.msra.mxu0 0.0
  %401 = vmatprep.subr.mxu0 0.0
  %402 = vmatpush1.msra.mxu0 0.0
  %403 = vmatprep.subr.mxu0 0.0
  %404 = vmatpush1.msra.mxu0 0.0
  %405 = vmatprep.subr.mxu0 0.0
  %406 = vmatpush1.msra.mxu0 0.0
  %407 = vmatprep.subr.mxu0 0.0
  %408 = vmatpush1.msra.mxu0 0.0
  %409 = vmatprep.subr.mxu0 0.0
  %410 = vmatpush1.msra.mxu0 0.0
  %411 = vmatprep.subr.mxu0 0.0
  %412 = vmatpush1.msra.mxu0 0.0
  %413 = vmatprep.subr.mxu0 0.0
  %414 = vmatpush1.msra.mxu0 0.0
  %415 = vmatprep.subr.mxu0 0.0
  %416 = vmatpush1.msra.mxu0 0.0
  %417 = vmatprep.subr.mxu0 0.0
  %418 = vmatpush1.msra.mxu0 0.0
  %419 = vmatprep.subr.mxu0 0.0
  %420 = vmatpush1.msra.mxu0 0.0
  %421 = vmatprep.mubr.f32.mxu0 0.0
  %422 = vmatmul.mubr.f32.gmra.mrb[0].mxu0 %v310
  %v423 = vpop.f32.mrb[0].mxu0
  %v424 = vadd.f32 %v306, %v423
  %v425 = vpop.f32.mrb[0].mxu0
  %426 = vmatprep.mubr.f32.mxu0 0.0
  %427 = vmatmul.mubr.f32.gmra.mrb[0].mxu0 %v313
  %v428 = vpop.f32.mrb[0].mxu0
  %v429 = vadd.f32 %v306, %v428
  %v430 = vpop.f32.mrb[0].mxu0
  %431 = vmatprep.mubr.f32.mxu0 0.0
  %432 = vmatmul.mubr.f32.gmra.mrb[0].mxu0 %v316
  %v433 = vpop.f32.mrb[0].mxu0
  %v434 = vadd.f32 %v306, %v433
  %v435 = vpop.f32.mrb[0].mxu0
  %436 = vmatprep.mubr.f32.mxu0 0.0
  %437 = vmatmul.mubr.f32.gmra.mrb[0].mxu0 %v319
  %v438 = vpop.f32.mrb[0].mxu0
  %v439 = vadd.f32 %v306, %v438
  %v440 = vpop.f32.mrb[0].mxu0
  %441 = vmatprep.mubr.f32.mxu0 0.0
  %442 = vmatmul.mubr.f32.gmra.mrb[0].mxu0 %v322
  %v443 = vpop.f32.mrb[0].mxu0
  %v444 = vadd.f32 %v306, %v443
  %v445 = vpop.f32.mrb[0].mxu0
  %446 = vmatprep.mubr.f32.mxu0 0.0
  %447 = vmatmul.mubr.f32.gmra.mrb[0].mxu0 %v325
  %v448 = vpop.f32.mrb[0].mxu0
  %v449 = vadd.f32 %v306, %v448
  %v450 = vpop.f32.mrb[0].mxu0
  %451 = vmatprep.mubr.f32.mxu0 0.0
  %452 = vmatmul.mubr.f32.gmra.mrb[0].mxu0 %v328
  %v453 = vpop.f32.mrb[0].mxu0
  %v454 = vadd.f32 %v306, %v453
  %v455 = vpop.f32.mrb[0].mxu0
  %456 = vmatprep.mubr.f32.mxu0 0.0
  %457 = vmatmul.mubr.f32.gmra.mrb[0].mxu0 %v331
  %v458 = vpop.f32.mrb[0].mxu0
  %v459 = vadd.f32 %v306, %v458
  %v460 = vpop.f32.mrb[0].mxu0
  %461 = vmatprep.mubr.f32.mxu0 0.0
  %462 = vmatmul.mubr.f32.gmra.mrb[0].mxu0 %v334
  %v463 = vpop.f32.mrb[0].mxu0
  %v464 = vadd.f32 %v306, %v463
  %v465 = vpop.f32.mrb[0].mxu0
  %466 = vmatprep.mubr.f32.mxu0 0.0
  %467 = vmatmul.mubr.f32.gmra.mrb[0].mxu0 %v337
  %v468 = vpop.f32.mrb[0].mxu0
  %v469 = vadd.f32 %v306, %v468
  %v470 = vpop.f32.mrb[0].mxu0
  %471 = vmatprep.mubr.f32.mxu0 0.0
  %472 = vmatmul.mubr.f32.gmra.mrb[0].mxu0 %v340
  %v473 = vpop.f32.mrb[0].mxu0
  %v474 = vadd.f32 %v306, %v473
  %v475 = vpop.f32.mrb[0].mxu0
  %476 = vmatprep.mubr.f32.mxu0 0.0
  %477 = vmatmul.mubr.f32.gmra.mrb[0].mxu0 %v343
  %v478 = vpop.f32.mrb[0].mxu0
  %v479 = vadd.f32 %v306, %v478
  %v480 = vpop.f32.mrb[0].mxu0
  %481 = vmatprep.mubr.f32.mxu0 0.0
  %482 = vmatmul.mubr.f32.gmra.mrb[0].mxu0 %v346
  %v483 = vpop.f32.mrb[0].mxu0
  %v484 = vadd.f32 %v306, %v483
  %v485 = vpop.f32.mrb[0].mxu0
  %486 = vmatprep.mubr.f32.mxu0 0.0
  %487 = vmatmul.mubr.f32.gmra.mrb[0].mxu0 %v349
  %v488 = vpop.f32.mrb[0].mxu0
  %v489 = vadd.f32 %v306, %v488
  %v490 = vpop.f32.mrb[0].mxu0
  %491 = vmatprep.mubr.f32.mxu0 0.0
  %492 = vmatmul.mubr.f32.gmra.mrb[0].mxu0 %v352
  %v493 = vpop.f32.mrb[0].mxu0
  %v494 = vadd.f32 %v306, %v493
  %v495 = vpop.f32.mrb[0].mxu0
  %496 = vmatprep.mubr.f32.mxu0 0.0
  %497 = vmatmul.mubr.f32.gmra.mrb[0].mxu0 %v355
  %v498 = vpop.f32.mrb[0].mxu0
  %v499 = vadd.f32 %v306, %v498
  %v500 = vpop.f32.mrb[0].mxu0
  %501 = vdwg.mxu0
  %v502 = vmax.f32 %v424, 0.0
  %v503 = vmax.f32 %v429, 0.0
  %v504 = vmax.f32 %v434, 0.0
  %v505 = vmax.f32 %v439, 0.0
  %v506 = vmax.f32 %v444, 0.0
  %v507 = vmax.f32 %v449, 0.0
  %v508 = vmax.f32 %v454, 0.0
  %v509 = vmax.f32 %v459, 0.0
  %v510 = vmax.f32 %v464, 0.0
  %v511 = vmax.f32 %v469, 0.0
  %v512 = vmax.f32 %v474, 0.0
  %v513 = vmax.f32 %v479, 0.0
  %v514 = vmax.f32 %v484, 0.0
  %v515 = vmax.f32 %v489, 0.0
  %v516 = vmax.f32 %v494, 0.0
  %v517 = vmax.f32 %v499, 0.0
  %v518 = vld [vmem:[%s6] sm:$0xff]
  %v519 = vld [vmem:[%s6 + $0x8] sm:$0xff]
  %v520 = vld [vmem:[%s6 + $0x10] sm:$0xff]
  %v521 = vld [vmem:[%s6 + $0x18] sm:$0xff]
  %v522 = vld [vmem:[%s6 + $0x20] sm:$0xff]
  %v523 = vld [vmem:[%s6 + $0x28] sm:$0xff]
  %v524 = vld [vmem:[%s6 + $0x30] sm:$0xff]
  %v525 = vld [vmem:[%s6 + $0x38] sm:$0xff]
  %v526 = vld [vmem:[%s7] sm:$0xff]
  %v527 = vld [vmem:[%s7 + $0x8] sm:$0xff]
  %v528 = vld [vmem:[%s7 + $0x10] sm:$0xff]
  %v529 = vld [vmem:[%s7 + $0x18] sm:$0xff]
  %v530 = vld [vmem:[%s7 + $0x20] sm:$0xff]
  %v531 = vld [vmem:[%s7 + $0x28] sm:$0xff]
  %v533 = vsel %vm83, %v54, 0
  %v536 = vsel %vm83, %v55, 0
  %v539 = vsel %vm83, %v56, 0
  %v542 = vsel %vm83, %v57, 0
  %v545 = vsel %vm83, %v58, 0
  %v548 = vsel %vm83, %v59, 0
  %v551 = vsel %vm83, %v60, 0
  %v554 = vsel %vm83, %v61, 0
  %v557 = vsel %vm83, %v62, 0
  %v560 = vsel %vm83, %v63, 0
  %v563 = vsel %vm83, %v64, 0
  %v566 = vsel %vm83, %v65, 0
  %v569 = vsel %vm83, %v66, 0
  %v572 = vsel %vm83, %v67, 0
  %v575 = vsel %vm83, %v68, 0
  %v578 = vsel %vm83, %v69, 0
  %580 = vmatprep.subr.mxu0 0.0
  %581 = vmatpush1.msra.mxu0 %v526
  %582 = vmatprep.subr.mxu0 0.0
  %583 = vmatpush1.msra.mxu0 %v527
  %584 = vmatprep.subr.mxu0 0.0
  %585 = vmatpush1.msra.mxu0 %v528
  %586 = vmatprep.subr.mxu0 0.0
  %587 = vmatpush1.msra.mxu0 %v529
  %588 = vmatprep.subr.mxu0 0.0
  %589 = vmatpush1.msra.mxu0 %v530
  %590 = vmatprep.subr.mxu0 0.0
  %591 = vmatpush1.msra.mxu0 %v531
  %592 = vmatprep.subr.mxu0 0.0
  %593 = vmatpush1.msra.mxu0 0.0
  %594 = vmatprep.subr.mxu0 0.0
  %595 = vmatpush1.msra.mxu0 0.0
  %596 = vmatprep.subr.mxu0 0.0
  %597 = vmatpush1.msra.mxu0 0.0
  %598 = vmatprep.subr.mxu0 0.0
  %599 = vmatpush1.msra.mxu0 0.0
  %600 = vmatprep.subr.mxu0 0.0
  %601 = vmatpush1.msra.mxu0 0.0
  %602 = vmatprep.subr.mxu0 0.0
  %603 = vmatpush1.msra.mxu0 0.0
  %604 = vmatprep.subr.mxu0 0.0
  %605 = vmatpush1.msra.mxu0 0.0
  %606 = vmatprep.subr.mxu0 0.0
  %607 = vmatpush1.msra.mxu0 0.0
  %608 = vmatprep.subr.mxu0 0.0
  %609 = vmatpush1.msra.mxu0 0.0
  %610 = vmatprep.subr.mxu0 0.0
  %611 = vmatpush1.msra.mxu0 0.0
  %612 = vmatprep.subr.mxu0 0.0
  %613 = vmatpush1.msra.mxu0 0.0
  %614 = vmatprep.subr.mxu0 0.0
  %615 = vmatpush1.msra.mxu0 0.0
  %616 = vmatprep.subr.mxu0 0.0
  %617 = vmatpush1.msra.mxu0 0.0
  %618 = vmatprep.subr.mxu0 0.0
  %619 = vmatpush1.msra.mxu0 0.0
  %620 = vmatprep.subr.mxu0 0.0
  %621 = vmatpush1.msra.mxu0 0.0
  %622 = vmatprep.subr.mxu0 0.0
  %623 = vmatpush1.msra.mxu0 0.0
  %624 = vmatprep.subr.mxu0 0.0
  %625 = vmatpush1.msra.mxu0 0.0
  %626 = vmatprep.subr.mxu0 0.0
  %627 = vmatpush1.msra.mxu0 0.0
  %628 = vmatprep.subr.mxu0 0.0
  %629 = vmatpush1.msra.mxu0 0.0
  %630 = vmatprep.subr.mxu0 0.0
  %631 = vmatpush1.msra.mxu0 0.0
  %632 = vmatprep.subr.mxu0 0.0
  %633 = vmatpush1.msra.mxu0 0.0
  %634 = vmatprep.subr.mxu0 0.0
  %635 = vmatpush1.msra.mxu0 0.0
  %636 = vmatprep.subr.mxu0 0.0
  %637 = vmatpush1.msra.mxu0 0.0
  %638 = vmatprep.subr.mxu0 0.0
  %639 = vmatpush1.msra.mxu0 0.0
  %640 = vmatprep.subr.mxu0 0.0
  %641 = vmatpush1.msra.mxu0 0.0
  %642 = vmatprep.subr.mxu0 0.0
  %643 = vmatpush1.msra.mxu0 0.0
  %644 = vmatprep.mubr.f32.mxu0 0.0
  %645 = vmatmul.mubr.f32.gmra.mrb[0].mxu0 %v533
  %v646 = vpop.f32.mrb[0].mxu0
  %v647 = vadd.f32 0.0, %v646
  %v648 = vpop.f32.mrb[0].mxu0
  %649 = vmatprep.mubr.f32.mxu0 0.0
  %650 = vmatmul.mubr.f32.gmra.mrb[0].mxu0 %v536
  %v651 = vpop.f32.mrb[0].mxu0
  %v652 = vadd.f32 0.0, %v651
  %v653 = vpop.f32.mrb[0].mxu0
  %654 = vmatprep.mubr.f32.mxu0 0.0
  %655 = vmatmul.mubr.f32.gmra.mrb[0].mxu0 %v539
  %v656 = vpop.f32.mrb[0].mxu0
  %v657 = vadd.f32 0.0, %v656
  %v658 = vpop.f32.mrb[0].mxu0
  %659 = vmatprep.mubr.f32.mxu0 0.0
  %660 = vmatmul.mubr.f32.gmra.mrb[0].mxu0 %v542
  %v661 = vpop.f32.mrb[0].mxu0
  %v662 = vadd.f32 0.0, %v661
  %v663 = vpop.f32.mrb[0].mxu0
  %664 = vmatprep.mubr.f32.mxu0 0.0
  %665 = vmatmul.mubr.f32.gmra.mrb[0].mxu0 %v545
  %v666 = vpop.f32.mrb[0].mxu0
  %v667 = vadd.f32 0.0, %v666
  %v668 = vpop.f32.mrb[0].mxu0
  %669 = vmatprep.mubr.f32.mxu0 0.0
  %670 = vmatmul.mubr.f32.gmra.mrb[0].mxu0 %v548
  %v671 = vpop.f32.mrb[0].mxu0
  %v672 = vadd.f32 0.0, %v671
  %v673 = vpop.f32.mrb[0].mxu0
  %674 = vmatprep.mubr.f32.mxu0 0.0
  %675 = vmatmul.mubr.f32.gmra.mrb[0].mxu0 %v551
  %v676 = vpop.f32.mrb[0].mxu0
  %v677 = vadd.f32 0.0, %v676
  %v678 = vpop.f32.mrb[0].mxu0
  %679 = vmatprep.mubr.f32.mxu0 0.0
  %680 = vmatmul.mubr.f32.gmra.mrb[0].mxu0 %v554
  %v681 = vpop.f32.mrb[0].mxu0
  %v682 = vadd.f32 0.0, %v681
  %v683 = vpop.f32.mrb[0].mxu0
  %684 = vmatprep.mubr.f32.mxu0 0.0
  %685 = vmatmul.mubr.f32.gmra.mrb[0].mxu0 %v557
  %v686 = vpop.f32.mrb[0].mxu0
  %v687 = vadd.f32 0.0, %v686
  %v688 = vpop.f32.mrb[0].mxu0
  %689 = vmatprep.mubr.f32.mxu0 0.0
  %690 = vmatmul.mubr.f32.gmra.mrb[0].mxu0 %v560
  %v691 = vpop.f32.mrb[0].mxu0
  %v692 = vadd.f32 0.0, %v691
  %v693 = vpop.f32.mrb[0].mxu0
  %694 = vmatprep.mubr.f32.mxu0 0.0
  %695 = vmatmul.mubr.f32.gmra.mrb[0].mxu0 %v563
  %v696 = vpop.f32.mrb[0].mxu0
  %v697 = vadd.f32 0.0, %v696
  %v698 = vpop.f32.mrb[0].mxu0
  %699 = vmatprep.mubr.f32.mxu0 0.0
  %700 = vmatmul.mubr.f32.gmra.mrb[0].mxu0 %v566
  %v701 = vpop.f32.mrb[0].mxu0
  %v702 = vadd.f32 0.0, %v701
  %v703 = vpop.f32.mrb[0].mxu0
  %704 = vmatprep.mubr.f32.mxu0 0.0
  %705 = vmatmul.mubr.f32.gmra.mrb[0].mxu0 %v569
  %v706 = vpop.f32.mrb[0].mxu0
  %v707 = vadd.f32 0.0, %v706
  %v708 = vpop.f32.mrb[0].mxu0
  %709 = vmatprep.mubr.f32.mxu0 0.0
  %710 = vmatmul.mubr.f32.gmra.mrb[0].mxu0 %v572
  %v711 = vpop.f32.mrb[0].mxu0
  %v712 = vadd.f32 0.0, %v711
  %v713 = vpop.f32.mrb[0].mxu0
  %714 = vmatprep.mubr.f32.mxu0 0.0
  %715 = vmatmul.mubr.f32.gmra.mrb[0].mxu0 %v575
  %v716 = vpop.f32.mrb[0].mxu0
  %v717 = vadd.f32 0.0, %v716
  %v718 = vpop.f32.mrb[0].mxu0
  %719 = vmatprep.mubr.f32.mxu0 0.0
  %720 = vmatmul.mubr.f32.gmra.mrb[0].mxu0 %v578
  %v721 = vpop.f32.mrb[0].mxu0
  %v722 = vadd.f32 0.0, %v721
  %v723 = vpop.f32.mrb[0].mxu0
  %724 = vdwg.mxu0
  %v726 = vsel %vm308, %v502, 0
  %v729 = vsel %vm308, %v503, 0
  %v732 = vsel %vm308, %v504, 0
  %v735 = vsel %vm308, %v505, 0
  %v738 = vsel %vm308, %v506, 0
  %v741 = vsel %vm308, %v507, 0
  %v744 = vsel %vm308, %v508, 0
  %v747 = vsel %vm308, %v509, 0
  %v750 = vsel %vm308, %v510, 0
  %v753 = vsel %vm308, %v511, 0
  %v756 = vsel %vm308, %v512, 0
  %v759 = vsel %vm308, %v513, 0
  %v762 = vsel %vm308, %v514, 0
  %v765 = vsel %vm308, %v515, 0
  %v768 = vsel %vm308, %v516, 0
  %v771 = vsel %vm308, %v517, 0
  %773 = vmatprep.subr.mxu0 0.0
  %774 = vmatpush1.msra.mxu0 %v518
  %775 = vmatprep.subr.mxu0 0.0
  %776 = vmatpush1.msra.mxu0 %v519
  %777 = vmatprep.subr.mxu0 0.0
  %778 = vmatpush1.msra.mxu0 %v520
  %779 = vmatprep.subr.mxu0 0.0
  %780 = vmatpush1.msra.mxu0 %v521
  %781 = vmatprep.subr.mxu0 0.0
  %782 = vmatpush1.msra.mxu0 %v522
  %783 = vmatprep.subr.mxu0 0.0
  %784 = vmatpush1.msra.mxu0 %v523
  %785 = vmatprep.subr.mxu0 0.0
  %786 = vmatpush1.msra.mxu0 %v524
  %787 = vmatprep.subr.mxu0 0.0
  %788 = vmatpush1.msra.mxu0 %v525
  %789 = vmatprep.subr.mxu0 0.0
  %790 = vmatpush1.msra.mxu0 0.0
  %791 = vmatprep.subr.mxu0 0.0
  %792 = vmatpush1.msra.mxu0 0.0
  %793 = vmatprep.subr.mxu0 0.0
  %794 = vmatpush1.msra.mxu0 0.0
  %795 = vmatprep.subr.mxu0 0.0
  %796 = vmatpush1.msra.mxu0 0.0
  %797 = vmatprep.subr.mxu0 0.0
  %798 = vmatpush1.msra.mxu0 0.0
  %799 = vmatprep.subr.mxu0 0.0
  %800 = vmatpush1.msra.mxu0 0.0
  %801 = vmatprep.subr.mxu0 0.0
  %802 = vmatpush1.msra.mxu0 0.0
  %803 = vmatprep.subr.mxu0 0.0
  %804 = vmatpush1.msra.mxu0 0.0
  %805 = vmatprep.subr.mxu0 0.0
  %806 = vmatpush1.msra.mxu0 0.0
  %807 = vmatprep.subr.mxu0 0.0
  %808 = vmatpush1.msra.mxu0 0.0
  %809 = vmatprep.subr.mxu0 0.0
  %810 = vmatpush1.msra.mxu0 0.0
  %811 = vmatprep.subr.mxu0 0.0
  %812 = vmatpush1.msra.mxu0 0.0
  %813 = vmatprep.subr.mxu0 0.0
  %814 = vmatpush1.msra.mxu0 0.0
  %815 = vmatprep.subr.mxu0 0.0
  %816 = vmatpush1.msra.mxu0 0.0
  %817 = vmatprep.subr.mxu0 0.0
  %818 = vmatpush1.msra.mxu0 0.0
  %819 = vmatprep.subr.mxu0 0.0
  %820 = vmatpush1.msra.mxu0 0.0
  %821 = vmatprep.subr.mxu0 0.0
  %822 = vmatpush1.msra.mxu0 0.0
  %823 = vmatprep.subr.mxu0 0.0
  %824 = vmatpush1.msra.mxu0 0.0
  %825 = vmatprep.subr.mxu0 0.0
  %826 = vmatpush1.msra.mxu0 0.0
  %827 = vmatprep.subr.mxu0 0.0
  %828 = vmatpush1.msra.mxu0 0.0
  %829 = vmatprep.subr.mxu0 0.0
  %830 = vmatpush1.msra.mxu0 0.0
  %831 = vmatprep.subr.mxu0 0.0
  %832 = vmatpush1.msra.mxu0 0.0
  %833 = vmatprep.subr.mxu0 0.0
  %834 = vmatpush1.msra.mxu0 0.0
  %835 = vmatprep.subr.mxu0 0.0
  %836 = vmatpush1.msra.mxu0 0.0
  %837 = vmatprep.mubr.f32.mxu0 0.0
  %838 = vmatmul.mubr.f32.gmra.mrb[0].mxu0 %v726
  %v839 = vpop.f32.mrb[0].mxu0
  %v840 = vadd.f32 %v647, %v839
  %v841 = vpop.f32.mrb[0].mxu0
  %842 = vmatprep.mubr.f32.mxu0 0.0
  %843 = vmatmul.mubr.f32.gmra.mrb[0].mxu0 %v729
  %v844 = vpop.f32.mrb[0].mxu0
  %v845 = vadd.f32 %v652, %v844
  %v846 = vpop.f32.mrb[0].mxu0
  %847 = vmatprep.mubr.f32.mxu0 0.0
  %848 = vmatmul.mubr.f32.gmra.mrb[0].mxu0 %v732
  %v849 = vpop.f32.mrb[0].mxu0
  %v850 = vadd.f32 %v657, %v849
  %v851 = vpop.f32.mrb[0].mxu0
  %852 = vmatprep.mubr.f32.mxu0 0.0
  %853 = vmatmul.mubr.f32.gmra.mrb[0].mxu0 %v735
  %v854 = vpop.f32.mrb[0].mxu0
  %v855 = vadd.f32 %v662, %v854
  %v856 = vpop.f32.mrb[0].mxu0
  %857 = vmatprep.mubr.f32.mxu0 0.0
  %858 = vmatmul.mubr.f32.gmra.mrb[0].mxu0 %v738
  %v859 = vpop.f32.mrb[0].mxu0
  %v860 = vadd.f32 %v667, %v859
  %v861 = vpop.f32.mrb[0].mxu0
  %862 = vmatprep.mubr.f32.mxu0 0.0
  %863 = vmatmul.mubr.f32.gmra.mrb[0].mxu0 %v741
  %v864 = vpop.f32.mrb[0].mxu0
  %v865 = vadd.f32 %v672, %v864
  %v866 = vpop.f32.mrb[0].mxu0
  %867 = vmatprep.mubr.f32.mxu0 0.0
  %868 = vmatmul.mubr.f32.gmra.mrb[0].mxu0 %v744
  %v869 = vpop.f32.mrb[0].mxu0
  %v870 = vadd.f32 %v677, %v869
  %v871 = vpop.f32.mrb[0].mxu0
  %872 = vmatprep.mubr.f32.mxu0 0.0
  %873 = vmatmul.mubr.f32.gmra.mrb[0].mxu0 %v747
  %v874 = vpop.f32.mrb[0].mxu0
  %v875 = vadd.f32 %v682, %v874
  %v876 = vpop.f32.mrb[0].mxu0
  %877 = vmatprep.mubr.f32.mxu0 0.0
  %878 = vmatmul.mubr.f32.gmra.mrb[0].mxu0 %v750
  %v879 = vpop.f32.mrb[0].mxu0
  %v880 = vadd.f32 %v687, %v879
  %v881 = vpop.f32.mrb[0].mxu0
  %882 = vmatprep.mubr.f32.mxu0 0.0
  %883 = vmatmul.mubr.f32.gmra.mrb[0].mxu0 %v753
  %v884 = vpop.f32.mrb[0].mxu0
  %v885 = vadd.f32 %v692, %v884
  %v886 = vpop.f32.mrb[0].mxu0
  %887 = vmatprep.mubr.f32.mxu0 0.0
  %888 = vmatmul.mubr.f32.gmra.mrb[0].mxu0 %v756
  %v889 = vpop.f32.mrb[0].mxu0
  %v890 = vadd.f32 %v697, %v889
  %v891 = vpop.f32.mrb[0].mxu0
  %892 = vmatprep.mubr.f32.mxu0 0.0
  %893 = vmatmul.mubr.f32.gmra.mrb[0].mxu0 %v759
  %v894 = vpop.f32.mrb[0].mxu0
  %v895 = vadd.f32 %v702, %v894
  %v896 = vpop.f32.mrb[0].mxu0
  %897 = vmatprep.mubr.f32.mxu0 0.0
  %898 = vmatmul.mubr.f32.gmra.mrb[0].mxu0 %v762
  %v899 = vpop.f32.mrb[0].mxu0
  %v900 = vadd.f32 %v707, %v899
  %v901 = vpop.f32.mrb[0].mxu0
  %902 = vmatprep.mubr.f32.mxu0 0.0
  %903 = vmatmul.mubr.f32.gmra.mrb[0].mxu0 %v765
  %v904 = vpop.f32.mrb[0].mxu0
  %v905 = vadd.f32 %v712, %v904
  %v906 = vpop.f32.mrb[0].mxu0
  %907 = vmatprep.mubr.f32.mxu0 0.0
  %908 = vmatmul.mubr.f32.gmra.mrb[0].mxu0 %v768
  %v909 = vpop.f32.mrb[0].mxu0
  %v910 = vadd.f32 %v717, %v909
  %v911 = vpop.f32.mrb[0].mxu0
  %912 = vmatprep.mubr.f32.mxu0 0.0
  %913 = vmatmul.mubr.f32.gmra.mrb[0].mxu0 %v771
  %v914 = vpop.f32.mrb[0].mxu0
  %v915 = vadd.f32 %v722, %v914
  %v916 = vpop.f32.mrb[0].mxu0
  %917 = vdwg.mxu0
  %v918 = vld [vmem:[%s8] sm:$0x1]
  %v920 = vlaneseq
  %v921 = vshrl.u32 %v920, 7
  %v922 = vsub.s32 0, %v921
  %v923 = vrot.slane %v918, %v922
  %v925 = vadd.f32 %v840, %v923
  %v926 = vadd.f32 %v845, %v923
  %v927 = vadd.f32 %v850, %v923
  %v928 = vadd.f32 %v855, %v923
  %v929 = vadd.f32 %v860, %v923
  %v930 = vadd.f32 %v865, %v923
  %v931 = vadd.f32 %v870, %v923
  %v932 = vadd.f32 %v875, %v923
  %v933 = vadd.f32 %v880, %v923
  %v934 = vadd.f32 %v885, %v923
  %v935 = vadd.f32 %v890, %v923
  %v936 = vadd.f32 %v895, %v923
  %v937 = vadd.f32 %v900, %v923
  %v938 = vadd.f32 %v905, %v923
  %v939 = vadd.f32 %v910, %v923
  %v940 = vadd.f32 %v915, %v923
  %v941 = vmax.f32 %v925, 0.0
  %v942 = vmax.f32 %v926, 0.0
  %v943 = vmax.f32 %v927, 0.0
  %v944 = vmax.f32 %v928, 0.0
  %v945 = vmax.f32 %v929, 0.0
  %v946 = vmax.f32 %v930, 0.0
  %v947 = vmax.f32 %v931, 0.0
  %v948 = vmax.f32 %v932, 0.0
  %v949 = vmax.f32 %v933, 0.0
  %v950 = vmax.f32 %v934, 0.0
  %v951 = vmax.f32 %v935, 0.0
  %v952 = vmax.f32 %v936, 0.0
  %v953 = vmax.f32 %v937, 0.0
  %v954 = vmax.f32 %v938, 0.0
  %v955 = vmax.f32 %v939, 0.0
  %v956 = vmax.f32 %v940, 0.0
  %v957 = vld [vmem:[%s9] sm:$0xff]
  %v958 = vld [vmem:[%s9 + $0x8] sm:$0xff]
  %v959 = vld [vmem:[%s9 + $0x10] sm:$0xff]
  %v960 = vld [vmem:[%s9 + $0x18] sm:$0xff]
  %v961 = vld [vmem:[%s9 + $0x20] sm:$0xff]
  %v962 = vld [vmem:[%s9 + $0x28] sm:$0xff]
  %v963 = vld [vmem:[%s9 + $0x30] sm:$0xff]
  %v964 = vld [vmem:[%s9 + $0x38] sm:$0xff]
  %v965 = vld [vmem:[%s10] sm:$0x1]
  %v967 = vlaneseq
  %v968 = vshrl.u32 %v967, 7
  %v969 = vsub.s32 0, %v968
  %v970 = vrot.slane %v965, %v969
  %v973 = vsel %vm308, %v941, 0
  %v976 = vsel %vm308, %v942, 0
  %v979 = vsel %vm308, %v943, 0
  %v982 = vsel %vm308, %v944, 0
  %v985 = vsel %vm308, %v945, 0
  %v988 = vsel %vm308, %v946, 0
  %v991 = vsel %vm308, %v947, 0
  %v994 = vsel %vm308, %v948, 0
  %v997 = vsel %vm308, %v949, 0
  %v1000 = vsel %vm308, %v950, 0
  %v1003 = vsel %vm308, %v951, 0
  %v1006 = vsel %vm308, %v952, 0
  %v1009 = vsel %vm308, %v953, 0
  %v1012 = vsel %vm308, %v954, 0
  %v1015 = vsel %vm308, %v955, 0
  %v1018 = vsel %vm308, %v956, 0
  %1020 = vmatprep.subr.mxu0 0.0
  %1021 = vmatpush1.msra.mxu0 %v957
  %1022 = vmatprep.subr.mxu0 0.0
  %1023 = vmatpush1.msra.mxu0 %v958
  %1024 = vmatprep.subr.mxu0 0.0
  %1025 = vmatpush1.msra.mxu0 %v959
  %1026 = vmatprep.subr.mxu0 0.0
  %1027 = vmatpush1.msra.mxu0 %v960
  %1028 = vmatprep.subr.mxu0 0.0
  %1029 = vmatpush1.msra.mxu0 %v961
  %1030 = vmatprep.subr.mxu0 0.0
  %1031 = vmatpush1.msra.mxu0 %v962
  %1032 = vmatprep.subr.mxu0 0.0
  %1033 = vmatpush1.msra.mxu0 %v963
  %1034 = vmatprep.subr.mxu0 0.0
  %1035 = vmatpush1.msra.mxu0 %v964
  %1036 = vmatprep.subr.mxu0 0.0
  %1037 = vmatpush1.msra.mxu0 0.0
  %1038 = vmatprep.subr.mxu0 0.0
  %1039 = vmatpush1.msra.mxu0 0.0
  %1040 = vmatprep.subr.mxu0 0.0
  %1041 = vmatpush1.msra.mxu0 0.0
  %1042 = vmatprep.subr.mxu0 0.0
  %1043 = vmatpush1.msra.mxu0 0.0
  %1044 = vmatprep.subr.mxu0 0.0
  %1045 = vmatpush1.msra.mxu0 0.0
  %1046 = vmatprep.subr.mxu0 0.0
  %1047 = vmatpush1.msra.mxu0 0.0
  %1048 = vmatprep.subr.mxu0 0.0
  %1049 = vmatpush1.msra.mxu0 0.0
  %1050 = vmatprep.subr.mxu0 0.0
  %1051 = vmatpush1.msra.mxu0 0.0
  %1052 = vmatprep.subr.mxu0 0.0
  %1053 = vmatpush1.msra.mxu0 0.0
  %1054 = vmatprep.subr.mxu0 0.0
  %1055 = vmatpush1.msra.mxu0 0.0
  %1056 = vmatprep.subr.mxu0 0.0
  %1057 = vmatpush1.msra.mxu0 0.0
  %1058 = vmatprep.subr.mxu0 0.0
  %1059 = vmatpush1.msra.mxu0 0.0
  %1060 = vmatprep.subr.mxu0 0.0
  %1061 = vmatpush1.msra.mxu0 0.0
  %1062 = vmatprep.subr.mxu0 0.0
  %1063 = vmatpush1.msra.mxu0 0.0
  %1064 = vmatprep.subr.mxu0 0.0
  %1065 = vmatpush1.msra.mxu0 0.0
  %1066 = vmatprep.subr.mxu0 0.0
  %1067 = vmatpush1.msra.mxu0 0.0
  %1068 = vmatprep.subr.mxu0 0.0
  %1069 = vmatpush1.msra.mxu0 0.0
  %1070 = vmatprep.subr.mxu0 0.0
  %1071 = vmatpush1.msra.mxu0 0.0
  %1072 = vmatprep.subr.mxu0 0.0
  %1073 = vmatpush1.msra.mxu0 0.0
  %1074 = vmatprep.subr.mxu0 0.0
  %1075 = vmatpush1.msra.mxu0 0.0
  %1076 = vmatprep.subr.mxu0 0.0
  %1077 = vmatpush1.msra.mxu0 0.0
  %1078 = vmatprep.subr.mxu0 0.0
  %1079 = vmatpush1.msra.mxu0 0.0
  %1080 = vmatprep.subr.mxu0 0.0
  %1081 = vmatpush1.msra.mxu0 0.0
  %1082 = vmatprep.subr.mxu0 0.0
  %1083 = vmatpush1.msra.mxu0 0.0
  %1084 = vmatprep.mubr.f32.mxu0 0.0
  %1085 = vmatmul.mubr.f32.gmra.mrb[0].mxu0 %v973
  %v1086 = vpop.f32.mrb[0].mxu0
  %v1087 = vadd.f32 %v970, %v1086
  %v1088 = vpop.f32.mrb[0].mxu0
  %1089 = vmatprep.mubr.f32.mxu0 0.0
  %1090 = vmatmul.mubr.f32.gmra.mrb[0].mxu0 %v976
  %v1091 = vpop.f32.mrb[0].mxu0
  %v1092 = vadd.f32 %v970, %v1091
  %v1093 = vpop.f32.mrb[0].mxu0
  %1094 = vmatprep.mubr.f32.mxu0 0.0
  %1095 = vmatmul.mubr.f32.gmra.mrb[0].mxu0 %v979
  %v1096 = vpop.f32.mrb[0].mxu0
  %v1097 = vadd.f32 %v970, %v1096
  %v1098 = vpop.f32.mrb[0].mxu0
  %1099 = vmatprep.mubr.f32.mxu0 0.0
  %1100 = vmatmul.mubr.f32.gmra.mrb[0].mxu0 %v982
  %v1101 = vpop.f32.mrb[0].mxu0
  %v1102 = vadd.f32 %v970, %v1101
  %v1103 = vpop.f32.mrb[0].mxu0
  %1104 = vmatprep.mubr.f32.mxu0 0.0
  %1105 = vmatmul.mubr.f32.gmra.mrb[0].mxu0 %v985
  %v1106 = vpop.f32.mrb[0].mxu0
  %v1107 = vadd.f32 %v970, %v1106
  %v1108 = vpop.f32.mrb[0].mxu0
  %1109 = vmatprep.mubr.f32.mxu0 0.0
  %1110 = vmatmul.mubr.f32.gmra.mrb[0].mxu0 %v988
  %v1111 = vpop.f32.mrb[0].mxu0
  %v1112 = vadd.f32 %v970, %v1111
  %v1113 = vpop.f32.mrb[0].mxu0
  %1114 = vmatprep.mubr.f32.mxu0 0.0
  %1115 = vmatmul.mubr.f32.gmra.mrb[0].mxu0 %v991
  %v1116 = vpop.f32.mrb[0].mxu0
  %v1117 = vadd.f32 %v970, %v1116
  %v1118 = vpop.f32.mrb[0].mxu0
  %1119 = vmatprep.mubr.f32.mxu0 0.0
  %1120 = vmatmul.mubr.f32.gmra.mrb[0].mxu0 %v994
  %v1121 = vpop.f32.mrb[0].mxu0
  %v1122 = vadd.f32 %v970, %v1121
  %v1123 = vpop.f32.mrb[0].mxu0
  %1124 = vmatprep.mubr.f32.mxu0 0.0
  %1125 = vmatmul.mubr.f32.gmra.mrb[0].mxu0 %v997
  %v1126 = vpop.f32.mrb[0].mxu0
  %v1127 = vadd.f32 %v970, %v1126
  %v1128 = vpop.f32.mrb[0].mxu0
  %1129 = vmatprep.mubr.f32.mxu0 0.0
  %1130 = vmatmul.mubr.f32.gmra.mrb[0].mxu0 %v1000
  %v1131 = vpop.f32.mrb[0].mxu0
  %v1132 = vadd.f32 %v970, %v1131
  %v1133 = vpop.f32.mrb[0].mxu0
  %1134 = vmatprep.mubr.f32.mxu0 0.0
  %1135 = vmatmul.mubr.f32.gmra.mrb[0].mxu0 %v1003
  %v1136 = vpop.f32.mrb[0].mxu0
  %v1137 = vadd.f32 %v970, %v1136
  %v1138 = vpop.f32.mrb[0].mxu0
  %1139 = vmatprep.mubr.f32.mxu0 0.0
  %1140 = vmatmul.mubr.f32.gmra.mrb[0].mxu0 %v1006
  %v1141 = vpop.f32.mrb[0].mxu0
  %v1142 = vadd.f32 %v970, %v1141
  %v1143 = vpop.f32.mrb[0].mxu0
  %1144 = vmatprep.mubr.f32.mxu0 0.0
  %1145 = vmatmul.mubr.f32.gmra.mrb[0].mxu0 %v1009
  %v1146 = vpop.f32.mrb[0].mxu0
  %v1147 = vadd.f32 %v970, %v1146
  %v1148 = vpop.f32.mrb[0].mxu0
  %1149 = vmatprep.mubr.f32.mxu0 0.0
  %1150 = vmatmul.mubr.f32.gmra.mrb[0].mxu0 %v1012
  %v1151 = vpop.f32.mrb[0].mxu0
  %v1152 = vadd.f32 %v970, %v1151
  %v1153 = vpop.f32.mrb[0].mxu0
  %1154 = vmatprep.mubr.f32.mxu0 0.0
  %1155 = vmatmul.mubr.f32.gmra.mrb[0].mxu0 %v1015
  %v1156 = vpop.f32.mrb[0].mxu0
  %v1157 = vadd.f32 %v970, %v1156
  %v1158 = vpop.f32.mrb[0].mxu0
  %1159 = vmatprep.mubr.f32.mxu0 0.0
  %1160 = vmatmul.mubr.f32.gmra.mrb[0].mxu0 %v1018
  %v1161 = vpop.f32.mrb[0].mxu0
  %v1162 = vadd.f32 %v970, %v1161
  %v1163 = vpop.f32.mrb[0].mxu0
  %1164 = vdwg.mxu0
  %v1165 = vmax.f32 %v1087, 0.0
  %v1166 = vmax.f32 %v1092, 0.0
  %v1167 = vmax.f32 %v1097, 0.0
  %v1168 = vmax.f32 %v1102, 0.0
  %v1169 = vmax.f32 %v1107, 0.0
  %v1170 = vmax.f32 %v1112, 0.0
  %v1171 = vmax.f32 %v1117, 0.0
  %v1172 = vmax.f32 %v1122, 0.0
  %v1173 = vmax.f32 %v1127, 0.0
  %v1174 = vmax.f32 %v1132, 0.0
  %v1175 = vmax.f32 %v1137, 0.0
  %v1176 = vmax.f32 %v1142, 0.0
  %v1177 = vmax.f32 %v1147, 0.0
  %v1178 = vmax.f32 %v1152, 0.0
  %v1179 = vmax.f32 %v1157, 0.0
  %v1180 = vmax.f32 %v1162, 0.0
  %1181 = vst.msk [vmem:[%s11] sm:$0xff] %vm308, %v1165
  %1182 = vst.msk [vmem:[%s11 + $0x8] sm:$0xff] %vm308, %v1166
  %1183 = vst.msk [vmem:[%s11 + $0x10] sm:$0xff] %vm308, %v1167
  %1184 = vst.msk [vmem:[%s11 + $0x18] sm:$0xff] %vm308, %v1168
  %1185 = vst.msk [vmem:[%s11 + $0x20] sm:$0xff] %vm308, %v1169
  %1186 = vst.msk [vmem:[%s11 + $0x28] sm:$0xff] %vm308, %v1170
  %1187 = vst.msk [vmem:[%s11 + $0x30] sm:$0xff] %vm308, %v1171
  %1188 = vst.msk [vmem:[%s11 + $0x38] sm:$0xff] %vm308, %v1172
  %1189 = vst.msk [vmem:[%s11 + $0x40] sm:$0xff] %vm308, %v1173
  %1190 = vst.msk [vmem:[%s11 + $0x48] sm:$0xff] %vm308, %v1174
  %1191 = vst.msk [vmem:[%s11 + $0x50] sm:$0xff] %vm308, %v1175
  %1192 = vst.msk [vmem:[%s11 + $0x58] sm:$0xff] %vm308, %v1176
  %1193 = vst.msk [vmem:[%s11 + $0x60] sm:$0xff] %vm308, %v1177
  %1194 = vst.msk [vmem:[%s11 + $0x68] sm:$0xff] %vm308, %v1178
  %1195 = vst.msk [vmem:[%s11 + $0x70] sm:$0xff] %vm308, %v1179
  %1196 = vst.msk [vmem:[%s11 + $0x78] sm:$0xff] %vm308, %v1180
  // Predicated region
  $region46: #{tpu_custom_call.1} parent=0 // pred_check
    _
  $region47: #{tpu_custom_call.1} parent=0 // pred_check_branch
    %1198 = sbr.rel (0) target = $region49
  $region48: #{tpu_custom_call.1} parent=0 // pred_region
    _
  $region49: #{tpu_custom_call.1} parent=0 // pred_fallthru
    _
  // Predicated region
  $region50: #{tpu_custom_call.1} parent=0 // pred_check
    _
  $region51: #{tpu_custom_call.1} parent=0 // pred_check_branch
    %1200 = sbr.rel (0) target = $region53
  $region52: #{tpu_custom_call.1} parent=0 // pred_region
    _
  $region53: #{tpu_custom_call.1} parent=0 // pred_fallthru
    _

</llo_original>
